<compile_context>
chip_gen: v5e
topology: v5e:2x2
jax: 0.10.0
libtpu: 0.0.40
codegen_flags: <defaults>
</compile_context>

<pallas_src>
import functools

import jax
import jax.numpy as jnp
from jax.experimental import pallas as pl
from jax.experimental.pallas import tpu as pltpu

_EPS = 1e-5  # nn.InstanceNorm2d default eps


def _up_conv_kernel(x_ref, w_ref, b_ref, o_ref, sum_ref, sq_ref, *, n_spatial, eps):
    # x_ref : (1, 1, Th+2, W+2, Cin)   one halo'd row tile of the ORIGINAL input
    # w_ref : (9*Cin, 4*Cout)          fused (tap, phase) weight matrix
    # b_ref : (1, 4*Cout)              bias replicated over the 4 phases (f32)
    # o_ref : (1, Th, W, 4*Cout)       phase-packed output tile
    # sum_ref, sq_ref : (1, 4*Cout) f32 scratch (per-sample running moments)
    p_id = pl.program_id(1)   # 0 = stats pass, 1 = normalize/store pass
    t_id = pl.program_id(2)   # row-tile index

    Th = o_ref.shape[1]
    W = o_ref.shape[2]
    C4 = o_ref.shape[3]
    C = C4 // 4
    Cin = x_ref.shape[-1]

    x = x_ref[0, 0]           # (Th+2, W+2, Cin)

    # im2col over the 3x3 taps at ORIGINAL resolution, one fused MXU matmul.
    patches = []
    for r in range(3):
        for s in range(3):
            patches.append(x[r:r + Th, s:s + W, :])          # (Th, W, Cin)
    p2 = jnp.concatenate(patches, axis=-1).reshape(Th * W, 9 * Cin)

    acc = jnp.dot(p2, w_ref[...], preferred_element_type=jnp.float32)
    acc = acc + b_ref[...]                                   # (Th*W, 4*Cout), f32

    @pl.when(jnp.logical_and(p_id == 0, t_id == 0))
    def _init():
        sum_ref[...] = jnp.zeros_like(sum_ref)
        sq_ref[...] = jnp.zeros_like(sq_ref)

    @pl.when(p_id == 0)
    def _accumulate_stats():
        sum_ref[...] += acc.sum(axis=0, keepdims=True)
        sq_ref[...] += (acc * acc).sum(axis=0, keepdims=True)

    @pl.when(p_id == 1)
    def _normalize_store():
        s = sum_ref[...]                                     # (1, 4*Cout)
        q = sq_ref[...]
        # fold the 4 phase groups -> per-channel global moments
        s_c = s[:, 0:C] + s[:, C:2 * C] + s[:, 2 * C:3 * C] + s[:, 3 * C:4 * C]
        q_c = q[:, 0:C] + q[:, C:2 * C] + q[:, 2 * C:3 * C] + q[:, 3 * C:4 * C]
        inv_n = 1.0 / float(n_spatial)
        mean = s_c * inv_n
        var = q_c * inv_n - mean * mean                      # biased variance
        rstd = jax.lax.rsqrt(var + eps)
        mean4 = jnp.concatenate([mean, mean, mean, mean], axis=1)
        rstd4 = jnp.concatenate([rstd, rstd, rstd, rstd], axis=1)
        y = jnp.maximum((acc - mean4) * rstd4, 0.0)
        o_ref[...] = y.reshape(1, Th, W, C4).astype(o_ref.dtype)


def _fuse_upsample_conv_weights(w, cin, cout, dtype):
    """(Cout, Cin, 3, 3) -> (9*Cin, 4*Cout) fused (tap, phase) weight matrix.

    Output pixel (2i+a, 2j+b) of Upsample(2, nearest)+Conv3x3(pad=1) equals a
    3x3 conv on the ORIGINAL zero-padded input with tap (r, s), where original
    tap (dh, dw) maps to r = (a+dh+1)//2, s = (b+dw+1)//2 (taps merging onto
    the same (r, s) are summed; out-of-range rows/cols fall on the zero pad).
    """
    w_t = jnp.transpose(w, (2, 3, 1, 0)).astype(jnp.float32)   # (dh, dw, ci, co)
    w_big = jnp.zeros((3, 3, cin, 2, 2, cout), dtype=jnp.float32)
    for a in range(2):
        for bb in range(2):
            for dh in range(3):
                for dw in range(3):
                    r = (a + dh + 1) // 2
                    s = (bb + dw + 1) // 2
                    w_big = w_big.at[r, s, :, a, bb, :].add(w_t[dh, dw])
    # row index = (r*3 + s)*Cin + ci ; col index = (a*2 + b)*Cout + co
    return w_big.reshape(9 * cin, 4 * cout).astype(dtype)


def up_conv_forward(x_nchw, w, b, *, row_tile=64):
    """x: (N, Cin, H, W); w: (Cout, Cin, 3, 3); b: (Cout,) -> (N, Cout, 2H, 2W)."""
    N, Cin, H, W = x_nchw.shape
    Cout = w.shape[0]
    H2, W2 = 2 * H, 2 * W

    # largest divisor of H not exceeding row_tile
    Th = 1
    for t in range(1, min(H, row_tile) + 1):
        if H % t == 0:
            Th = t
    nH = H // Th

    # NCHW -> NHWC, pad 1 at ORIGINAL resolution (4x smaller than padding the
    # upsampled image), then pre-extract row tiles with a 2-row halo.
    x_nhwc = jnp.transpose(x_nchw, (0, 2, 3, 1))
    x_pad = jnp.pad(x_nhwc, ((0, 0), (1, 1), (1, 1), (0, 0)))          # (N, H+2, W+2, Cin)
    x_tiles = jnp.stack([x_pad[:, i0:i0 + Th + 2] for i0 in range(0, H, Th)],
                        axis=1)                                        # (N, nH, Th+2, W+2, Cin)

    w_big = _fuse_upsample_conv_weights(w, Cin, Cout, x_nchw.dtype)    # (9*Cin, 4*Cout)
    b_big = jnp.tile(b.astype(jnp.float32).reshape(1, Cout), (1, 4))   # (1, 4*Cout)

    kernel = functools.partial(_up_conv_kernel, n_spatial=4 * H * W, eps=_EPS)

    out_packed = pl.pallas_call(
        kernel,
        out_shape=jax.ShapeDtypeStruct((N, H, W, 4 * Cout), x_nchw.dtype),
        grid=(N, 2, nH),
        in_specs=[
            pl.BlockSpec((1, 1, Th + 2, W + 2, Cin), lambda n, p, t: (n, t, 0, 0, 0)),
            pl.BlockSpec((9 * Cin, 4 * Cout), lambda n, p, t: (0, 0)),
            pl.BlockSpec((1, 4 * Cout), lambda n, p, t: (0, 0)),
        ],
        # p=0 (stats pass): all steps map to block 0 and the kernel never
        # writes it, so no garbage output tiles are flushed; p=1 writes and
        # flushes every tile exactly once.
        out_specs=pl.BlockSpec((1, Th, W, 4 * Cout), lambda n, p, t: (n, p * t, 0, 0)),
        scratch_shapes=[
            pltpu.VMEM((1, 4 * Cout), jnp.float32),   # per-channel sum
            pltpu.VMEM((1, 4 * Cout), jnp.float32),   # per-channel sum of squares
        ],
        compiler_params=pltpu.CompilerParams(
            dimension_semantics=("parallel", "arbitrary", "arbitrary"),
            vmem_limit_bytes=64 * 1024 * 1024,
        ),
    )(x_tiles, w_big, b_big)

    # unpack phases: (N, H, W, a, b, C) -> (N, C, H, a, W, b) -> (N, C, 2H, 2W)
    out = out_packed.reshape(N, H, W, 2, 2, Cout)
    out = jnp.transpose(out, (0, 5, 1, 3, 2, 4)).reshape(N, Cout, H2, W2)
    return out


def up_conv_reference(x, w, b):
    """Pure-JAX reference of the PyTorch forward, for a correctness check."""
    x_up = jnp.repeat(jnp.repeat(x, 2, axis=2), 2, axis=3)
    y = jax.lax.conv_general_dilated(
        x_up.astype(jnp.float32), w.astype(jnp.float32),
        window_strides=(1, 1), padding=((1, 1), (1, 1)),
        dimension_numbers=("NCHW", "OIHW", "NCHW"),
    ) + b.reshape(1, -1, 1, 1)
    mean = y.mean(axis=(2, 3), keepdims=True)
    var = ((y - mean) ** 2).mean(axis=(2, 3), keepdims=True)
    y = (y - mean) / jnp.sqrt(var + _EPS)
    return jnp.maximum(y, 0.0)


if __name__ == "__main__":
    key = jax.random.PRNGKey(0)
    k_x, k_w, k_b = jax.random.split(key, 3)

    N, ch_in, H, W = 2, 4, 16, 16
    ch_out = 8

    x = jax.random.normal(k_x, (N, ch_in, H, W), dtype=jnp.float32)
    # deterministic synthetic params (Conv2d: weight (Cout, Cin, 3, 3), bias (Cout,))
    fan_in = ch_in * 3 * 3
    bound = 1.0 / jnp.sqrt(fan_in)
    w = jax.random.uniform(k_w, (ch_out, ch_in, 3, 3), jnp.float32, -bound, bound)
    b = jax.random.uniform(k_b, (ch_out,), jnp.float32, -bound, bound)

    # row_tile=8 -> 2 row tiles per image, exercising the two-pass InstanceNorm.
    out = up_conv_forward(x, w, b, row_tile=8)
    out = jax.block_until_ready(out)

    ref = up_conv_reference(x, w, b)
    assert out.shape == (N, ch_out, 2 * H, 2 * W), out.shape
    assert jnp.allclose(out, ref, atol=1e-3, rtol=1e-3), "mismatch vs reference"

    print("KERNEL_OK")
</pallas_src>

<mosaic_0001>
module attributes {stable_mosaic.version = 11 : i64} {
  func.func @_up_conv_kernel(%arg0: i32, %arg1: i32, %arg2: i32, %arg3: memref<1x1x10x18x4xf32, #tpu.memory_space<vmem>>, %arg4: memref<36x32xf32, #tpu.memory_space<vmem>>, %arg5: memref<1x32xf32, #tpu.memory_space<vmem>>, %arg6: memref<1x8x16x32xf32, #tpu.memory_space<vmem>>, %arg7: memref<1x32xf32, #tpu.memory_space<vmem>>, %arg8: memref<1x32xf32, #tpu.memory_space<vmem>>) attributes {dimension_semantics = [#tpu.dimension_semantics<parallel>, #tpu.dimension_semantics<arbitrary>, #tpu.dimension_semantics<arbitrary>], iteration_bounds = array<i64: 2, 2, 2>, scalar_prefetch = 0 : i64, scratch_operands = 2 : i64, tpu.core_type = #tpu.core_type<tc>, window_params = [{transform_indices = @transform_0, window_bounds = array<i64: 1, 1, 10, 18, 4>}, {pipeline_mode = #tpu.pipeline_mode<synchronous>, transform_indices = @transform_1, window_bounds = array<i64: 36, 32>}, {pipeline_mode = #tpu.pipeline_mode<synchronous>, transform_indices = @transform_2, window_bounds = array<i64: 1, 32>}, {transform_indices = @transform_3, window_bounds = array<i64: 1, 8, 16, 32>}]} {
    %c0 = arith.constant 0 : index
    %c0_0 = arith.constant 0 : index
    %c0_1 = arith.constant 0 : index
    %c0_2 = arith.constant 0 : index
    %c0_3 = arith.constant 0 : index
    %0 = vector.load %arg3[%c0, %c0_0, %c0_1, %c0_2, %c0_3] : memref<1x1x10x18x4xf32, #tpu.memory_space<vmem>>, vector<1x1x10x18x4xf32>
    %1 = vector.shape_cast %0 : vector<1x1x10x18x4xf32> to vector<10x18x4xf32>
    %2 = vector.extract_strided_slice %1 {offsets = [0, 0, 0], sizes = [8, 16, 4], strides = [1, 1, 1]} : vector<10x18x4xf32> to vector<8x16x4xf32>
    %3 = vector.extract_strided_slice %1 {offsets = [0, 1, 0], sizes = [8, 16, 4], strides = [1, 1, 1]} : vector<10x18x4xf32> to vector<8x16x4xf32>
    %4 = vector.extract_strided_slice %1 {offsets = [0, 2, 0], sizes = [8, 16, 4], strides = [1, 1, 1]} : vector<10x18x4xf32> to vector<8x16x4xf32>
    %5 = vector.extract_strided_slice %1 {offsets = [1, 0, 0], sizes = [8, 16, 4], strides = [1, 1, 1]} : vector<10x18x4xf32> to vector<8x16x4xf32>
    %6 = vector.extract_strided_slice %1 {offsets = [1, 1, 0], sizes = [8, 16, 4], strides = [1, 1, 1]} : vector<10x18x4xf32> to vector<8x16x4xf32>
    %7 = vector.extract_strided_slice %1 {offsets = [1, 2, 0], sizes = [8, 16, 4], strides = [1, 1, 1]} : vector<10x18x4xf32> to vector<8x16x4xf32>
    %8 = vector.extract_strided_slice %1 {offsets = [2, 0, 0], sizes = [8, 16, 4], strides = [1, 1, 1]} : vector<10x18x4xf32> to vector<8x16x4xf32>
    %9 = vector.extract_strided_slice %1 {offsets = [2, 1, 0], sizes = [8, 16, 4], strides = [1, 1, 1]} : vector<10x18x4xf32> to vector<8x16x4xf32>
    %10 = vector.extract_strided_slice %1 {offsets = [2, 2, 0], sizes = [8, 16, 4], strides = [1, 1, 1]} : vector<10x18x4xf32> to vector<8x16x4xf32>
    %11 = tpu.concatenate %2, %3, %4, %5, %6, %7, %8, %9, %10 in 2 : vector<8x16x4xf32>, vector<8x16x4xf32>, vector<8x16x4xf32>, vector<8x16x4xf32>, vector<8x16x4xf32>, vector<8x16x4xf32>, vector<8x16x4xf32>, vector<8x16x4xf32>, vector<8x16x4xf32> -> vector<8x16x36xf32>
    %12 = vector.shape_cast %11 : vector<8x16x36xf32> to vector<128x36xf32>
    %c0_4 = arith.constant 0 : index
    %c0_5 = arith.constant 0 : index
    %13 = vector.load %arg4[%c0_4, %c0_5] : memref<36x32xf32, #tpu.memory_space<vmem>>, vector<36x32xf32>
    %cst = arith.constant dense<0.000000e+00> : vector<128x32xf32>
    %14 = tpu.matmul %12, %13, %cst {dimension_numbers = #tpu.dot_dimension_numbers<[1], [0], [0], [1], [0, 0, 1, 1], [], []>} : vector<128x36xf32>, vector<36x32xf32>, vector<128x32xf32> -> vector<128x32xf32>
    %c0_6 = arith.constant 0 : index
    %c0_7 = arith.constant 0 : index
    %15 = vector.load %arg5[%c0_6, %c0_7] : memref<1x32xf32, #tpu.memory_space<vmem>>, vector<1x32xf32>
    %16 = vector.broadcast %15 : vector<1x32xf32> to vector<128x32xf32>
    %17 = arith.addf %14, %16 : vector<128x32xf32>
    %c0_i32 = arith.constant 0 : i32
    %18 = arith.cmpi eq, %arg1, %c0_i32 : i32
    %c0_i32_8 = arith.constant 0 : i32
    %19 = arith.cmpi eq, %arg2, %c0_i32_8 : i32
    %20 = arith.andi %18, %19 : i1
    %21 = arith.extui %20 : i1 to i32
    %c0_i32_9 = arith.constant 0 : i32
    %22 = arith.cmpi ne, %21, %c0_i32_9 : i32
    scf.if %22 {
      %cst_13 = arith.constant 0.000000e+00 : f32
      %29 = vector.broadcast %cst_13 : f32 to vector<1x32xf32>
      %c0_14 = arith.constant 0 : index
      %c0_15 = arith.constant 0 : index
      %30 = vector.load %arg7[%c0_14, %c0_15] : memref<1x32xf32, #tpu.memory_space<vmem>>, vector<1x32xf32>
      tpu.vector_store %arg7[%c0_14, %c0_15], %29 {strides = array<i32>} : memref<1x32xf32, #tpu.memory_space<vmem>>, vector<1x32xf32>,
      %cst_16 = arith.constant 0.000000e+00 : f32
      %31 = vector.broadcast %cst_16 : f32 to vector<1x32xf32>
      %c0_17 = arith.constant 0 : index
      %c0_18 = arith.constant 0 : index
      %32 = vector.load %arg8[%c0_17, %c0_18] : memref<1x32xf32, #tpu.memory_space<vmem>>, vector<1x32xf32>
      tpu.vector_store %arg8[%c0_17, %c0_18], %31 {strides = array<i32>} : memref<1x32xf32, #tpu.memory_space<vmem>>, vector<1x32xf32>,
    } else {
    }
    %c0_i32_10 = arith.constant 0 : i32
    %23 = arith.cmpi eq, %arg1, %c0_i32_10 : i32
    %24 = arith.extui %23 : i1 to i32
    %c0_i32_11 = arith.constant 0 : i32
    %25 = arith.cmpi ne, %24, %c0_i32_11 : i32
    scf.if %25 {
      %c0_13 = arith.constant 0 : index
      %c0_14 = arith.constant 0 : index
      %29 = vector.load %arg7[%c0_13, %c0_14] : memref<1x32xf32, #tpu.memory_space<vmem>>, vector<1x32xf32>
      %cst_15 = arith.constant dense<0.000000e+00> : vector<32xf32>
      %30 = vector.multi_reduction <add>, %17, %cst_15 [0] : vector<128x32xf32> to vector<32xf32>
      %31 = vector.shape_cast %30 : vector<32xf32> to vector<1x32xf32>
      %32 = arith.addf %29, %31 : vector<1x32xf32>
      %c0_16 = arith.constant 0 : index
      %c0_17 = arith.constant 0 : index
      %33 = vector.load %arg7[%c0_16, %c0_17] : memref<1x32xf32, #tpu.memory_space<vmem>>, vector<1x32xf32>
      tpu.vector_store %arg7[%c0_16, %c0_17], %32 {strides = array<i32>} : memref<1x32xf32, #tpu.memory_space<vmem>>, vector<1x32xf32>,
      %c0_18 = arith.constant 0 : index
      %c0_19 = arith.constant 0 : index
      %34 = vector.load %arg8[%c0_18, %c0_19] : memref<1x32xf32, #tpu.memory_space<vmem>>, vector<1x32xf32>
      %35 = arith.mulf %17, %17 : vector<128x32xf32>
      %cst_20 = arith.constant dense<0.000000e+00> : vector<32xf32>
      %36 = vector.multi_reduction <add>, %35, %cst_20 [0] : vector<128x32xf32> to vector<32xf32>
      %37 = vector.shape_cast %36 : vector<32xf32> to vector<1x32xf32>
      %38 = arith.addf %34, %37 : vector<1x32xf32>
      %c0_21 = arith.constant 0 : index
      %c0_22 = arith.constant 0 : index
      %39 = vector.load %arg8[%c0_21, %c0_22] : memref<1x32xf32, #tpu.memory_space<vmem>>, vector<1x32xf32>
      tpu.vector_store %arg8[%c0_21, %c0_22], %38 {strides = array<i32>} : memref<1x32xf32, #tpu.memory_space<vmem>>, vector<1x32xf32>,
    } else {
    }
    %c1_i32 = arith.constant 1 : i32
    %26 = arith.cmpi eq, %arg1, %c1_i32 : i32
    %27 = arith.extui %26 : i1 to i32
    %c0_i32_12 = arith.constant 0 : i32
    %28 = arith.cmpi ne, %27, %c0_i32_12 : i32
    scf.if %28 {
      %c0_13 = arith.constant 0 : index
      %c0_14 = arith.constant 0 : index
      %29 = vector.load %arg7[%c0_13, %c0_14] : memref<1x32xf32, #tpu.memory_space<vmem>>, vector<1x32xf32>
      %c0_15 = arith.constant 0 : index
      %c0_16 = arith.constant 0 : index
      %30 = vector.load %arg8[%c0_15, %c0_16] : memref<1x32xf32, #tpu.memory_space<vmem>>, vector<1x32xf32>
      %31 = vector.extract_strided_slice %29 {offsets = [0, 0], sizes = [1, 8], strides = [1, 1]} : vector<1x32xf32> to vector<1x8xf32>
      %32 = vector.extract_strided_slice %29 {offsets = [0, 8], sizes = [1, 8], strides = [1, 1]} : vector<1x32xf32> to vector<1x8xf32>
      %33 = arith.addf %31, %32 : vector<1x8xf32>
      %34 = vector.extract_strided_slice %29 {offsets = [0, 16], sizes = [1, 8], strides = [1, 1]} : vector<1x32xf32> to vector<1x8xf32>
      %35 = arith.addf %33, %34 : vector<1x8xf32>
      %36 = vector.extract_strided_slice %29 {offsets = [0, 24], sizes = [1, 8], strides = [1, 1]} : vector<1x32xf32> to vector<1x8xf32>
      %37 = arith.addf %35, %36 : vector<1x8xf32>
      %38 = vector.extract_strided_slice %30 {offsets = [0, 0], sizes = [1, 8], strides = [1, 1]} : vector<1x32xf32> to vector<1x8xf32>
      %39 = vector.extract_strided_slice %30 {offsets = [0, 8], sizes = [1, 8], strides = [1, 1]} : vector<1x32xf32> to vector<1x8xf32>
      %40 = arith.addf %38, %39 : vector<1x8xf32>
      %41 = vector.extract_strided_slice %30 {offsets = [0, 16], sizes = [1, 8], strides = [1, 1]} : vector<1x32xf32> to vector<1x8xf32>
      %42 = arith.addf %40, %41 : vector<1x8xf32>
      %43 = vector.extract_strided_slice %30 {offsets = [0, 24], sizes = [1, 8], strides = [1, 1]} : vector<1x32xf32> to vector<1x8xf32>
      %44 = arith.addf %42, %43 : vector<1x8xf32>
      %cst_17 = arith.constant 9.765625E-4 : f32
      %45 = vector.broadcast %cst_17 : f32 to vector<1x8xf32>
      %46 = arith.mulf %37, %45 : vector<1x8xf32>
      %cst_18 = arith.constant 9.765625E-4 : f32
      %47 = vector.broadcast %cst_18 : f32 to vector<1x8xf32>
      %48 = arith.mulf %44, %47 : vector<1x8xf32>
      %49 = arith.mulf %46, %46 : vector<1x8xf32>
      %50 = arith.subf %48, %49 : vector<1x8xf32>
      %cst_19 = arith.constant 9.99999974E-6 : f32
      %51 = vector.broadcast %cst_19 : f32 to vector<1x8xf32>
      %52 = arith.addf %50, %51 : vector<1x8xf32>
      %53 = math.rsqrt %52 : vector<1x8xf32>
      %54 = tpu.concatenate %46, %46, %46, %46 in 1 : vector<1x8xf32>, vector<1x8xf32>, vector<1x8xf32>, vector<1x8xf32> -> vector<1x32xf32>
      %55 = tpu.concatenate %53, %53, %53, %53 in 1 : vector<1x8xf32>, vector<1x8xf32>, vector<1x8xf32>, vector<1x8xf32> -> vector<1x32xf32>
      %56 = vector.broadcast %54 : vector<1x32xf32> to vector<128x32xf32>
      %57 = arith.subf %17, %56 : vector<128x32xf32>
      %58 = vector.broadcast %55 : vector<1x32xf32> to vector<128x32xf32>
      %59 = arith.mulf %57, %58 : vector<128x32xf32>
      %cst_20 = arith.constant 0.000000e+00 : f32
      %60 = vector.broadcast %cst_20 : f32 to vector<128x32xf32>
      %61 = arith.maximumf %59, %60 : vector<128x32xf32>
      %62 = vector.shape_cast %61 : vector<128x32xf32> to vector<1x8x16x32xf32>
      %c0_21 = arith.constant 0 : index
      %c0_22 = arith.constant 0 : index
      %c0_23 = arith.constant 0 : index
      %c0_24 = arith.constant 0 : index
      %63 = vector.load %arg6[%c0_21, %c0_22, %c0_23, %c0_24] : memref<1x8x16x32xf32, #tpu.memory_space<vmem>>, vector<1x8x16x32xf32>
      tpu.vector_store %arg6[%c0_21, %c0_22, %c0_23, %c0_24], %62 {strides = array<i32>} : memref<1x8x16x32xf32, #tpu.memory_space<vmem>>, vector<1x8x16x32xf32>,
    } else {
    }
    return
  }
  func.func @transform_0(%arg0: i32, %arg1: i32, %arg2: i32) -> (i32, i32, i32, i32, i32) {
    %c0_i32 = arith.constant 0 : i32
    %c0_i32_0 = arith.constant 0 : i32
    %c0_i32_1 = arith.constant 0 : i32
    %c0_i32_2 = arith.constant 0 : i32
    return %arg0, %arg2, %c0_i32, %c0_i32_0, %c0_i32_1 : i32, i32, i32, i32, i32
  }
  func.func @transform_1(%arg0: i32, %arg1: i32, %arg2: i32) -> (i32, i32) {
    %c0_i32 = arith.constant 0 : i32
    %c0_i32_0 = arith.constant 0 : i32
    %c0_i32_1 = arith.constant 0 : i32
    return %c0_i32, %c0_i32_0 : i32, i32
  }
  func.func @transform_2(%arg0: i32, %arg1: i32, %arg2: i32) -> (i32, i32) {
    %c0_i32 = arith.constant 0 : i32
    %c0_i32_0 = arith.constant 0 : i32
    %c0_i32_1 = arith.constant 0 : i32
    return %c0_i32, %c0_i32_0 : i32, i32
  }
  func.func @transform_3(%arg0: i32, %arg1: i32, %arg2: i32) -> (i32, i32, i32, i32) {
    %0 = arith.muli %arg1, %arg2 : i32
    %c0_i32 = arith.constant 0 : i32
    %c0_i32_0 = arith.constant 0 : i32
    %c0_i32_1 = arith.constant 0 : i32
    return %arg0, %0, %c0_i32, %c0_i32_0 : i32, i32, i32, i32
  }
}

</mosaic_0001>

<llo_original>
// kernel: tpu_custom_call.1
$region0: #{tpu_custom_call.1}
  #allocation0 [shape = 'u32[]', space=smem, size = 0x4, offset = 0x4, fixed_abs, tag = 'smem constant byte address 0x4 - core index']
  #allocation1 [shape = 'u32[72,128]{1,0:T(1,128)}', space=vmem, size = 0x9000, scoped, tag = 'internal scratch']
  #allocation2 [shape = 'f32[1,32]{1,0:T(1,128)}', space=vmem, size = 0x200, scoped, tag = 'scratch operand']
  #allocation3 [shape = 'f32[1,32]{1,0:T(1,128)}', space=vmem, size = 0x200, scoped, tag = 'scratch operand']
  %s0 = inlined_call_operand.vmem [shape: f32[2,2,10,18,4], index: 0, kind: input, shape index: {}]
  %s1 = inlined_call_operand.vmem [shape: f32[36,32], index: 1, kind: input, shape index: {}]
  %s2 = inlined_call_operand.vmem [shape: f32[1,32], index: 2, kind: input, shape index: {}]
  %s3 = inlined_call_operand.hbm [shape: f32[2,16,16,32], index: 3, kind: output, shape index: {}]
  %s4 = sld [smem:[#allocation0]]
  $region57: #{tpu_custom_call.1} parent=0
    _
  %s6 = ssub.s32 1, %s4
  %s7 = scalar_select 0, %s6, %s4
  $region1: #{tpu_custom_call.1} parent=0
    #allocation4 [shape = 'u8[131072]{0}', space=vmem, size = 0x20000, scoped, tag = 'output window, operand 0']
    #allocation5 [shape = 's32[2]{0}', space=sflag, size = 0x8, scoped, tag = 'scoped memory for tpu_custom_call.1']
    %8 = vsyncpa [#allocation5], 0
    %s9 = scalar_lea.sflag [#allocation5], 1
    %10 = vsyncpa %s9, 0
    loop: start=0, step=1, limit=10
    $region2: #{tpu_custom_call.1} parent=1 // loop_pre_header
      _
    $region3: #{tpu_custom_call.1} parent=1 // loop_header
      %s12 = sphi 0, %s16
      %p13 = scmp.ge.s32.totalorder %s12, 10
      %s19 = sphi 0, %s38
      %s20 = sphi 0, %s34
      %s21 = sphi 0, %s30
      %s22 = sphi 0, %s19
      %s23 = sphi 0, %s20
      %s24 = sphi 0, %s21
      %s25 = sphi 0, %s22
      %s26 = sphi 0, %s23
      %s27 = sphi 0, %s24
      %s43 = sphi 0, %s45
      %s46 = sphi 0, %s43
      %s47 = sphi 0, %s46
      %s63 = sphi 0, %s47
      %s67 = sphi 0, %s67
      %s69 = sphi 0, %s67
      %s70 = sphi 0, %s69
      %s84 = sphi 0, %s70
      %s88 = sphi 0, %s88
      %s90 = sphi 0, %s88
      %s91 = sphi 0, %s90
      %s105 = sphi 0, %s91
      %s115 = sphi 0, %s117
      %s118 = sphi 0, %s115
      %s119 = sphi 0, %s118
      %s135 = sphi 0, %s119
    $region4: #{tpu_custom_call.1} parent=1 // loop_header_branch
      %15 = sbr.rel (%p13) target = $region8
    $region5: #{tpu_custom_call.1} parent=1 // loop_body
      %s17 = ssub.s32 %s12, 1
      %s18 = ssub.s32 %s12, 2
      %s28 = sadd.s32 1, %s21
      %p29 = scmp.ge.s32.totalorder %s28, 2
      %s30 = scalar_select %p29, 0, %s28
      %s31 = sadd.s32 1, %s20
      %s32 = scalar_select %p29, %s31, %s20
      %p33 = scmp.ge.s32.totalorder %s32, 2
      %s34 = scalar_select %p33, 0, %s32
      %s35 = sadd.s32 1, %s19
      %s36 = scalar_select %p33, %s35, %s19
      %p37 = scmp.ge.s32.totalorder %s36, 2
      %s38 = scalar_select %p37, 0, %s36
      %s39 = ssub.s32 %s19, %s38
      %s40 = ssub.s32 %s21, %s30
      %s41 = sor.u32 %s39, %s40
      %p42 = scmp.eq.s32.totalorder %s41, 0
      %s44 = sadd.s32 %s43, 1
      %s45 = scalar_select %p42, %s43, %s44
      %p48 = pneg %p42
      %p49 = scmp.eq.s32.totalorder %s12, 7
      %p50 = por %p48, %p49
      %p51 = scmp.ne.s32.totalorder %s43, %s46
      %p52 = scmp.eq.s32.totalorder %s12, 0
      %p53 = por %p51, %p52
      %p54 = scmp.ne.s32.totalorder %s43, %s46
      %p55 = scmp.eq.s32.totalorder %s17, 7
      %p56 = por %p54, %p55
      %p57 = scmp.ne.s32.totalorder %s46, %s47
      %p58 = scmp.eq.s32.totalorder %s17, 0
      %p59 = por %p57, %p58
      %p60 = scmp.ne.s32.totalorder %s46, %s47
      %p61 = scmp.eq.s32.totalorder %s18, 7
      %p62 = por %p60, %p61
      %p64 = scmp.ne.s32.totalorder %s47, %s63
      %p65 = scmp.eq.s32.totalorder %s18, 0
      %p66 = por %p64, %p65
      %s68 = sadd.s32 %s67, 1
      %p71 = scmp.eq.s32.totalorder %s12, 7
      %p72 = scmp.ne.s32.totalorder %s67, %s69
      %p73 = scmp.eq.s32.totalorder %s12, 0
      %p74 = por %p72, %p73
      %p75 = scmp.ne.s32.totalorder %s67, %s69
      %p76 = scmp.eq.s32.totalorder %s17, 7
      %p77 = por %p75, %p76
      %p78 = scmp.ne.s32.totalorder %s69, %s70
      %p79 = scmp.eq.s32.totalorder %s17, 0
      %p80 = por %p78, %p79
      %p81 = scmp.ne.s32.totalorder %s69, %s70
      %p82 = scmp.eq.s32.totalorder %s18, 7
      %p83 = por %p81, %p82
      %p85 = scmp.ne.s32.totalorder %s70, %s84
      %p86 = scmp.eq.s32.totalorder %s18, 0
      %p87 = por %p85, %p86
      %s89 = sadd.s32 %s88, 1
      %p92 = scmp.eq.s32.totalorder %s12, 7
      %p93 = scmp.ne.s32.totalorder %s88, %s90
      %p94 = scmp.eq.s32.totalorder %s12, 0
      %p95 = por %p93, %p94
      %p96 = scmp.ne.s32.totalorder %s88, %s90
      %p97 = scmp.eq.s32.totalorder %s17, 7
      %p98 = por %p96, %p97
      %p99 = scmp.ne.s32.totalorder %s90, %s91
      %p100 = scmp.eq.s32.totalorder %s17, 0
      %p101 = por %p99, %p100
      %p102 = scmp.ne.s32.totalorder %s90, %s91
      %p103 = scmp.eq.s32.totalorder %s18, 7
      %p104 = por %p102, %p103
      %p106 = scmp.ne.s32.totalorder %s91, %s105
      %p107 = scmp.eq.s32.totalorder %s18, 0
      %p108 = por %p106, %p107
      %s109 = smul.u32 %s20, %s21
      %s110 = smul.u32 %s34, %s30
      %s111 = ssub.s32 %s19, %s38
      %s112 = ssub.s32 %s109, %s110
      %s113 = sor.u32 %s111, %s112
      %p114 = scmp.eq.s32.totalorder %s113, 0
      %s116 = sadd.s32 %s115, 1
      %s117 = scalar_select %p114, %s115, %s116
      %p120 = pneg %p114
      %p121 = scmp.eq.s32.totalorder %s12, 7
      %p122 = por %p120, %p121
      %p123 = scmp.ne.s32.totalorder %s115, %s118
      %p124 = scmp.eq.s32.totalorder %s12, 0
      %p125 = por %p123, %p124
      %p126 = scmp.ne.s32.totalorder %s115, %s118
      %p127 = scmp.eq.s32.totalorder %s17, 7
      %p128 = por %p126, %p127
      %p129 = scmp.ne.s32.totalorder %s118, %s119
      %p130 = scmp.eq.s32.totalorder %s17, 0
      %p131 = por %p129, %p130
      %p132 = scmp.ne.s32.totalorder %s118, %s119
      %p133 = scmp.eq.s32.totalorder %s18, 7
      %p134 = por %p132, %p133
      %p136 = scmp.ne.s32.totalorder %s119, %s135
      %p137 = scmp.eq.s32.totalorder %s18, 0
      %p138 = por %p136, %p137
      %p139 = scmp.le.s32.totalorder 1, %s12
      %p140 = scmp.lt.s32.totalorder %s12, 9
      %p141 = pnand %p139, %p140
      %p142 = pneg %p141
      // Predicated region
      $region9: #{tpu_custom_call.1} parent=5 // pred_check
        _
      $region10: #{tpu_custom_call.1} parent=5 // pred_check_branch
        %144 = sbr.rel (%p141) target = $region12
      $region11: #{tpu_custom_call.1} parent=5 // pred_region
        %s145 = ssub.s32 %s12, 1
        // Predicated region
        $region13: #{tpu_custom_call.1} parent=11 // pred_check
          %p146 = pneg %p80
        $region14: #{tpu_custom_call.1} parent=11 // pred_check_branch
          %148 = sbr.rel (%p146) target = $region16
        $region15: #{tpu_custom_call.1} parent=11 // pred_region
          _
        $region16: #{tpu_custom_call.1} parent=11 // pred_fallthru
          _
        // Predicated region
        $region17: #{tpu_custom_call.1} parent=11 // pred_check
          %p149 = pneg %p101
        $region18: #{tpu_custom_call.1} parent=11 // pred_check_branch
          %151 = sbr.rel (%p149) target = $region20
        $region19: #{tpu_custom_call.1} parent=11 // pred_region
          _
        $region20: #{tpu_custom_call.1} parent=11 // pred_fallthru
          _
      $region12: #{tpu_custom_call.1} parent=5 // pred_fallthru
        _
      %p152 = scmp.lt.s32.totalorder %s12, 8
      // Predicated region
      $region21: #{tpu_custom_call.1} parent=5 // pred_check
        %p153 = pneg %p152
      $region22: #{tpu_custom_call.1} parent=5 // pred_check_branch
        %155 = sbr.rel (%p153) target = $region24
      $region23: #{tpu_custom_call.1} parent=5 // pred_region
        // Predicated region
        $region25: #{tpu_custom_call.1} parent=23 // pred_check
          %p156 = pneg %p53
        $region26: #{tpu_custom_call.1} parent=23 // pred_check_branch
          %158 = sbr.rel (%p156) target = $region28
        $region27: #{tpu_custom_call.1} parent=23 // pred_region
          %p159 = scmp.lt.s32.totalorder %s19, 1
          %s160 = scalar_select %p159, %s19, 1
          %p161 = scmp.lt.s32.totalorder %s21, 1
          %s162 = scalar_select %p161, %s21, 1
          %s163 = smul.addr %s162, 30
          %s164 = smul.addr %s160, 60
          %s165 = sadd.s32 %s163, %s164
          %s166 = smul.addr %s165, 8
          %s167 = scalar_lea.vmem %s0, %s166
        $region28: #{tpu_custom_call.1} parent=23 // pred_fallthru
          _
      $region24: #{tpu_custom_call.1} parent=5 // pred_fallthru
        _
      %p168 = scmp.le.s32.totalorder 1, %s12
      %p169 = scmp.lt.s32.totalorder %s12, 9
      %p170 = pnand %p168, %p169
      %p171 = pneg %p170
      // Predicated region
      $region29: #{tpu_custom_call.1} parent=5 // pred_check
        _
      $region30: #{tpu_custom_call.1} parent=5 // pred_check_branch
        %173 = sbr.rel (%p170) target = $region32
      $region31: #{tpu_custom_call.1} parent=5 // pred_region
        %s174 = ssub.s32 %s12, 1
        %p175 = scmp.lt.s32.totalorder %s22, 1
        %s176 = scalar_select %p175, %s22, 1
        %p177 = scmp.lt.s32.totalorder %s24, 1
        %s178 = scalar_select %p177, %s24, 1
        %s179 = smul.addr %s178, 30
        %s180 = smul.addr %s176, 60
        %s181 = sadd.s32 %s179, %s180
        %s182 = smul.addr %s181, 8
        %s183 = scalar_lea.vmem %s0, %s182
        %p184 = pneg %p59
        %p185 = pneg %p56
        %p186 = pneg %p80
        %p187 = pneg %p77
        %p188 = pneg %p101
        %p189 = pneg %p98
        %p190 = pneg %p131
        %p191 = pneg %p128
        %s192 = sand.u32 %s118, 1
        %s193 = scalar_lea.sflag [#allocation5], %s192
        %s194 = sand.u32 %s118, 1
        %s195 = smul.addr %s194, 128
        %s196 = scalar_lea.vmem [#allocation4], %s195
        %p197 = scmp.lt.s32.totalorder %s22, 1
        %s198 = scalar_select %p197, %s22, 1
        %p199 = scmp.lt.s32.totalorder %s24, 1
        %s200 = scalar_select %p199, %s24, 1
        %s201 = smul.addr %s200, 30
        %s202 = smul.addr %s198, 60
        %s203 = sadd.s32 %s201, %s202
        %s204 = smul.addr %s203, 8
        %s205 = scalar_lea.vmem %s0, %s204
        %s206 = smul.u32 %s23, %s24
        %s207 = smul.u32 8, %s206
        %v208 = vld [vmem:[%s205] sm:$0xff]
        %v209 = vld [vmem:[%s205 + $0x8] sm:$0xff]
        %v210 = vld [vmem:[%s205 + $0x10] sm:$0x3]
        %v211 = vld [vmem:[%s205 + $0x18] sm:$0xff]
        %v212 = vld [vmem:[%s205 + $0x20] sm:$0xff]
        %v213 = vld [vmem:[%s205 + $0x28] sm:$0x3]
        %v214 = vld [vmem:[%s205 + $0x30] sm:$0xff]
        %v215 = vld [vmem:[%s205 + $0x38] sm:$0xff]
        %v216 = vld [vmem:[%s205 + $0x40] sm:$0x3]
        %v217 = vld [vmem:[%s205 + $0x48] sm:$0xff]
        %v218 = vld [vmem:[%s205 + $0x50] sm:$0xff]
        %v219 = vld [vmem:[%s205 + $0x58] sm:$0x3]
        %v220 = vld [vmem:[%s205 + $0x60] sm:$0xff]
        %v221 = vld [vmem:[%s205 + $0x68] sm:$0xff]
        %v222 = vld [vmem:[%s205 + $0x70] sm:$0x3]
        %v223 = vld [vmem:[%s205 + $0x78] sm:$0xff]
        %v224 = vld [vmem:[%s205 + $0x80] sm:$0xff]
        %v225 = vld [vmem:[%s205 + $0x88] sm:$0x3]
        %v226 = vld [vmem:[%s205 + $0x90] sm:$0xff]
        %v227 = vld [vmem:[%s205 + $0x98] sm:$0xff]
        %v228 = vld [vmem:[%s205 + $0xa0] sm:$0x3]
        %v229 = vld [vmem:[%s205 + $0xa8] sm:$0xff]
        %v230 = vld [vmem:[%s205 + $0xb0] sm:$0xff]
        %v231 = vld [vmem:[%s205 + $0xb8] sm:$0x3]
        %v232 = vld [vmem:[%s205 + $0xc0] sm:$0xff]
        %v233 = vld [vmem:[%s205 + $0xc8] sm:$0xff]
        %v234 = vld [vmem:[%s205 + $0xd0] sm:$0x3]
        %v235 = vld [vmem:[%s205 + $0xd8] sm:$0xff]
        %v236 = vld [vmem:[%s205 + $0xe0] sm:$0xff]
        %v237 = vld [vmem:[%s205 + $0xe8] sm:$0x3]
        %vm262 = vcmask 1046528
        %v263 = vrot.slane %v208, 1
        %v264 = vrot.slane %v209, 1
        %v265 = vsel %vm262, %v263, %v264
        %v266 = vrot.slane %v210, 1
        %v267 = vsel %vm262, %v264, %v266
        %v268 = vrot.slane %v211, 1
        %v269 = vrot.slane %v212, 1
        %v270 = vsel %vm262, %v268, %v269
        %v271 = vrot.slane %v213, 1
        %v272 = vsel %vm262, %v269, %v271
        %v273 = vrot.slane %v214, 1
        %v274 = vrot.slane %v215, 1
        %v275 = vsel %vm262, %v273, %v274
        %v276 = vrot.slane %v216, 1
        %v277 = vsel %vm262, %v274, %v276
        %v278 = vrot.slane %v217, 1
        %v279 = vrot.slane %v218, 1
        %v280 = vsel %vm262, %v278, %v279
        %v281 = vrot.slane %v219, 1
        %v282 = vsel %vm262, %v279, %v281
        %v283 = vrot.slane %v220, 1
        %v284 = vrot.slane %v221, 1
        %v285 = vsel %vm262, %v283, %v284
        %v286 = vrot.slane %v222, 1
        %v287 = vsel %vm262, %v284, %v286
        %v288 = vrot.slane %v223, 1
        %v289 = vrot.slane %v224, 1
        %v290 = vsel %vm262, %v288, %v289
        %v291 = vrot.slane %v225, 1
        %v292 = vsel %vm262, %v289, %v291
        %v293 = vrot.slane %v226, 1
        %v294 = vrot.slane %v227, 1
        %v295 = vsel %vm262, %v293, %v294
        %v296 = vrot.slane %v228, 1
        %v297 = vsel %vm262, %v294, %v296
        %v298 = vrot.slane %v229, 1
        %v299 = vrot.slane %v230, 1
        %v300 = vsel %vm262, %v298, %v299
        %v301 = vrot.slane %v231, 1
        %v302 = vsel %vm262, %v299, %v301
        %303 = vrot.lane.b32.xlu0 %v265, 4
        %v304 = vpop.permute.xlu0 %303
        %305 = vrot.lane.b32.xlu0 %v267, 4
        %v306 = vpop.permute.xlu0 %305
        %307 = vrot.lane.b32.xlu0 %v270, 4
        %v308 = vpop.permute.xlu0 %307
        %309 = vrot.lane.b32.xlu0 %v272, 4
        %v310 = vpop.permute.xlu0 %309
        %311 = vrot.lane.b32.xlu0 %v275, 4
        %v312 = vpop.permute.xlu0 %311
        %313 = vrot.lane.b32.xlu0 %v277, 4
        %v314 = vpop.permute.xlu0 %313
        %315 = vrot.lane.b32.xlu0 %v280, 4
        %v316 = vpop.permute.xlu0 %315
        %317 = vrot.lane.b32.xlu0 %v282, 4
        %v318 = vpop.permute.xlu0 %317
        %319 = vrot.lane.b32.xlu0 %v285, 4
        %v320 = vpop.permute.xlu0 %319
        %321 = vrot.lane.b32.xlu0 %v287, 4
        %v322 = vpop.permute.xlu0 %321
        %323 = vrot.lane.b32.xlu0 %v290, 4
        %v324 = vpop.permute.xlu0 %323
        %325 = vrot.lane.b32.xlu0 %v292, 4
        %v326 = vpop.permute.xlu0 %325
        %327 = vrot.lane.b32.xlu0 %v295, 4
        %v328 = vpop.permute.xlu0 %327
        %329 = vrot.lane.b32.xlu0 %v297, 4
        %v330 = vpop.permute.xlu0 %329
        %331 = vrot.lane.b32.xlu0 %v300, 4
        %v332 = vpop.permute.xlu0 %331
        %333 = vrot.lane.b32.xlu0 %v302, 4
        %v334 = vpop.permute.xlu0 %333
        %vm351 = vcmask 1045504
        %v352 = vrot.slane %v208, 2
        %v353 = vrot.slane %v209, 2
        %v354 = vsel %vm351, %v352, %v353
        %v355 = vrot.slane %v210, 2
        %v356 = vsel %vm351, %v353, %v355
        %v357 = vrot.slane %v211, 2
        %v358 = vrot.slane %v212, 2
        %v359 = vsel %vm351, %v357, %v358
        %v360 = vrot.slane %v213, 2
        %v361 = vsel %vm351, %v358, %v360
        %v362 = vrot.slane %v214, 2
        %v363 = vrot.slane %v215, 2
        %v364 = vsel %vm351, %v362, %v363
        %v365 = vrot.slane %v216, 2
        %v366 = vsel %vm351, %v363, %v365
        %v367 = vrot.slane %v217, 2
        %v368 = vrot.slane %v218, 2
        %v369 = vsel %vm351, %v367, %v368
        %v370 = vrot.slane %v219, 2
        %v371 = vsel %vm351, %v368, %v370
        %v372 = vrot.slane %v220, 2
        %v373 = vrot.slane %v221, 2
        %v374 = vsel %vm351, %v372, %v373
        %v375 = vrot.slane %v222, 2
        %v376 = vsel %vm351, %v373, %v375
        %v377 = vrot.slane %v223, 2
        %v378 = vrot.slane %v224, 2
        %v379 = vsel %vm351, %v377, %v378
        %v380 = vrot.slane %v225, 2
        %v381 = vsel %vm351, %v378, %v380
        %v382 = vrot.slane %v226, 2
        %v383 = vrot.slane %v227, 2
        %v384 = vsel %vm351, %v382, %v383
        %v385 = vrot.slane %v228, 2
        %v386 = vsel %vm351, %v383, %v385
        %v387 = vrot.slane %v229, 2
        %v388 = vrot.slane %v230, 2
        %v389 = vsel %vm351, %v387, %v388
        %v390 = vrot.slane %v231, 2
        %v391 = vsel %vm351, %v388, %v390
        %392 = vrot.lane.b32.xlu0 %v354, 8
        %v393 = vpop.permute.xlu0 %392
        %394 = vrot.lane.b32.xlu0 %v356, 8
        %v395 = vpop.permute.xlu0 %394
        %396 = vrot.lane.b32.xlu0 %v359, 8
        %v397 = vpop.permute.xlu0 %396
        %398 = vrot.lane.b32.xlu0 %v361, 8
        %v399 = vpop.permute.xlu0 %398
        %400 = vrot.lane.b32.xlu0 %v364, 8
        %v401 = vpop.permute.xlu0 %400
        %402 = vrot.lane.b32.xlu0 %v366, 8
        %v403 = vpop.permute.xlu0 %402
        %404 = vrot.lane.b32.xlu0 %v369, 8
        %v405 = vpop.permute.xlu0 %404
        %406 = vrot.lane.b32.xlu0 %v371, 8
        %v407 = vpop.permute.xlu0 %406
        %408 = vrot.lane.b32.xlu0 %v374, 8
        %v409 = vpop.permute.xlu0 %408
        %410 = vrot.lane.b32.xlu0 %v376, 8
        %v411 = vpop.permute.xlu0 %410
        %412 = vrot.lane.b32.xlu0 %v379, 8
        %v413 = vpop.permute.xlu0 %412
        %414 = vrot.lane.b32.xlu0 %v381, 8
        %v415 = vpop.permute.xlu0 %414
        %416 = vrot.lane.b32.xlu0 %v384, 8
        %v417 = vpop.permute.xlu0 %416
        %418 = vrot.lane.b32.xlu0 %v386, 8
        %v419 = vpop.permute.xlu0 %418
        %420 = vrot.lane.b32.xlu0 %v389, 8
        %v421 = vpop.permute.xlu0 %420
        %422 = vrot.lane.b32.xlu0 %v391, 8
        %v423 = vpop.permute.xlu0 %422
        %442 = vrot.lane.b32.xlu0 %v211, 12
        %v443 = vpop.permute.xlu0 %442
        %444 = vrot.lane.b32.xlu0 %v212, 12
        %v445 = vpop.permute.xlu0 %444
        %446 = vrot.lane.b32.xlu0 %v214, 12
        %v447 = vpop.permute.xlu0 %446
        %448 = vrot.lane.b32.xlu0 %v215, 12
        %v449 = vpop.permute.xlu0 %448
        %450 = vrot.lane.b32.xlu0 %v217, 12
        %v451 = vpop.permute.xlu0 %450
        %452 = vrot.lane.b32.xlu0 %v218, 12
        %v453 = vpop.permute.xlu0 %452
        %454 = vrot.lane.b32.xlu0 %v220, 12
        %v455 = vpop.permute.xlu0 %454
        %456 = vrot.lane.b32.xlu0 %v221, 12
        %v457 = vpop.permute.xlu0 %456
        %458 = vrot.lane.b32.xlu0 %v223, 12
        %v459 = vpop.permute.xlu0 %458
        %460 = vrot.lane.b32.xlu0 %v224, 12
        %v461 = vpop.permute.xlu0 %460
        %462 = vrot.lane.b32.xlu0 %v226, 12
        %v463 = vpop.permute.xlu0 %462
        %464 = vrot.lane.b32.xlu0 %v227, 12
        %v465 = vpop.permute.xlu0 %464
        %466 = vrot.lane.b32.xlu0 %v229, 12
        %v467 = vpop.permute.xlu0 %466
        %468 = vrot.lane.b32.xlu0 %v230, 12
        %v469 = vpop.permute.xlu0 %468
        %470 = vrot.lane.b32.xlu0 %v232, 12
        %v471 = vpop.permute.xlu0 %470
        %472 = vrot.lane.b32.xlu0 %v233, 12
        %v473 = vpop.permute.xlu0 %472
        %v491 = vrot.slane %v232, 1
        %v492 = vrot.slane %v233, 1
        %v493 = vsel %vm262, %v491, %v492
        %v494 = vrot.slane %v234, 1
        %v495 = vsel %vm262, %v492, %v494
        %496 = vrot.lane.b32.xlu0 %v270, 16
        %v497 = vpop.permute.xlu0 %496
        %498 = vrot.lane.b32.xlu0 %v272, 16
        %v499 = vpop.permute.xlu0 %498
        %500 = vrot.lane.b32.xlu0 %v275, 16
        %v501 = vpop.permute.xlu0 %500
        %502 = vrot.lane.b32.xlu0 %v277, 16
        %v503 = vpop.permute.xlu0 %502
        %504 = vrot.lane.b32.xlu0 %v280, 16
        %v505 = vpop.permute.xlu0 %504
        %506 = vrot.lane.b32.xlu0 %v282, 16
        %v507 = vpop.permute.xlu0 %506
        %508 = vrot.lane.b32.xlu0 %v285, 16
        %v509 = vpop.permute.xlu0 %508
        %510 = vrot.lane.b32.xlu0 %v287, 16
        %v511 = vpop.permute.xlu0 %510
        %512 = vrot.lane.b32.xlu0 %v290, 16
        %v513 = vpop.permute.xlu0 %512
        %514 = vrot.lane.b32.xlu0 %v292, 16
        %v515 = vpop.permute.xlu0 %514
        %516 = vrot.lane.b32.xlu0 %v295, 16
        %v517 = vpop.permute.xlu0 %516
        %518 = vrot.lane.b32.xlu0 %v297, 16
        %v519 = vpop.permute.xlu0 %518
        %520 = vrot.lane.b32.xlu0 %v300, 16
        %v521 = vpop.permute.xlu0 %520
        %522 = vrot.lane.b32.xlu0 %v302, 16
        %v523 = vpop.permute.xlu0 %522
        %524 = vrot.lane.b32.xlu0 %v493, 16
        %v525 = vpop.permute.xlu0 %524
        %526 = vrot.lane.b32.xlu0 %v495, 16
        %v527 = vpop.permute.xlu0 %526
        %v544 = vrot.slane %v232, 2
        %v545 = vrot.slane %v233, 2
        %v546 = vsel %vm351, %v544, %v545
        %v547 = vrot.slane %v234, 2
        %v548 = vsel %vm351, %v545, %v547
        %549 = vrot.lane.b32.xlu0 %v359, 20
        %v550 = vpop.permute.xlu0 %549
        %551 = vrot.lane.b32.xlu0 %v361, 20
        %v552 = vpop.permute.xlu0 %551
        %553 = vrot.lane.b32.xlu0 %v364, 20
        %v554 = vpop.permute.xlu0 %553
        %555 = vrot.lane.b32.xlu0 %v366, 20
        %v556 = vpop.permute.xlu0 %555
        %557 = vrot.lane.b32.xlu0 %v369, 20
        %v558 = vpop.permute.xlu0 %557
        %559 = vrot.lane.b32.xlu0 %v371, 20
        %v560 = vpop.permute.xlu0 %559
        %561 = vrot.lane.b32.xlu0 %v374, 20
        %v562 = vpop.permute.xlu0 %561
        %563 = vrot.lane.b32.xlu0 %v376, 20
        %v564 = vpop.permute.xlu0 %563
        %565 = vrot.lane.b32.xlu0 %v379, 20
        %v566 = vpop.permute.xlu0 %565
        %567 = vrot.lane.b32.xlu0 %v381, 20
        %v568 = vpop.permute.xlu0 %567
        %569 = vrot.lane.b32.xlu0 %v384, 20
        %v570 = vpop.permute.xlu0 %569
        %571 = vrot.lane.b32.xlu0 %v386, 20
        %v572 = vpop.permute.xlu0 %571
        %573 = vrot.lane.b32.xlu0 %v389, 20
        %v574 = vpop.permute.xlu0 %573
        %575 = vrot.lane.b32.xlu0 %v391, 20
        %v576 = vpop.permute.xlu0 %575
        %577 = vrot.lane.b32.xlu0 %v546, 20
        %v578 = vpop.permute.xlu0 %577
        %579 = vrot.lane.b32.xlu0 %v548, 20
        %v580 = vpop.permute.xlu0 %579
        %599 = vrot.lane.b32.xlu0 %v214, 24
        %v600 = vpop.permute.xlu0 %599
        %601 = vrot.lane.b32.xlu0 %v215, 24
        %v602 = vpop.permute.xlu0 %601
        %603 = vrot.lane.b32.xlu0 %v217, 24
        %v604 = vpop.permute.xlu0 %603
        %605 = vrot.lane.b32.xlu0 %v218, 24
        %v606 = vpop.permute.xlu0 %605
        %607 = vrot.lane.b32.xlu0 %v220, 24
        %v608 = vpop.permute.xlu0 %607
        %609 = vrot.lane.b32.xlu0 %v221, 24
        %v610 = vpop.permute.xlu0 %609
        %611 = vrot.lane.b32.xlu0 %v223, 24
        %v612 = vpop.permute.xlu0 %611
        %613 = vrot.lane.b32.xlu0 %v224, 24
        %v614 = vpop.permute.xlu0 %613
        %615 = vrot.lane.b32.xlu0 %v226, 24
        %v616 = vpop.permute.xlu0 %615
        %617 = vrot.lane.b32.xlu0 %v227, 24
        %v618 = vpop.permute.xlu0 %617
        %619 = vrot.lane.b32.xlu0 %v229, 24
        %v620 = vpop.permute.xlu0 %619
        %621 = vrot.lane.b32.xlu0 %v230, 24
        %v622 = vpop.permute.xlu0 %621
        %623 = vrot.lane.b32.xlu0 %v232, 24
        %v624 = vpop.permute.xlu0 %623
        %625 = vrot.lane.b32.xlu0 %v233, 24
        %v626 = vpop.permute.xlu0 %625
        %627 = vrot.lane.b32.xlu0 %v235, 24
        %v628 = vpop.permute.xlu0 %627
        %629 = vrot.lane.b32.xlu0 %v236, 24
        %v630 = vpop.permute.xlu0 %629
        %v648 = vrot.slane %v235, 1
        %v649 = vrot.slane %v236, 1
        %v650 = vsel %vm262, %v648, %v649
        %v651 = vrot.slane %v237, 1
        %v652 = vsel %vm262, %v649, %v651
        %653 = vrot.lane.b32.xlu0 %v275, 28
        %v654 = vpop.permute.xlu0 %653
        %655 = vrot.lane.b32.xlu0 %v277, 28
        %v656 = vpop.permute.xlu0 %655
        %657 = vrot.lane.b32.xlu0 %v280, 28
        %v658 = vpop.permute.xlu0 %657
        %659 = vrot.lane.b32.xlu0 %v282, 28
        %v660 = vpop.permute.xlu0 %659
        %661 = vrot.lane.b32.xlu0 %v285, 28
        %v662 = vpop.permute.xlu0 %661
        %663 = vrot.lane.b32.xlu0 %v287, 28
        %v664 = vpop.permute.xlu0 %663
        %665 = vrot.lane.b32.xlu0 %v290, 28
        %v666 = vpop.permute.xlu0 %665
        %667 = vrot.lane.b32.xlu0 %v292, 28
        %v668 = vpop.permute.xlu0 %667
        %669 = vrot.lane.b32.xlu0 %v295, 28
        %v670 = vpop.permute.xlu0 %669
        %671 = vrot.lane.b32.xlu0 %v297, 28
        %v672 = vpop.permute.xlu0 %671
        %673 = vrot.lane.b32.xlu0 %v300, 28
        %v674 = vpop.permute.xlu0 %673
        %675 = vrot.lane.b32.xlu0 %v302, 28
        %v676 = vpop.permute.xlu0 %675
        %677 = vrot.lane.b32.xlu0 %v493, 28
        %v678 = vpop.permute.xlu0 %677
        %679 = vrot.lane.b32.xlu0 %v495, 28
        %v680 = vpop.permute.xlu0 %679
        %681 = vrot.lane.b32.xlu0 %v650, 28
        %v682 = vpop.permute.xlu0 %681
        %683 = vrot.lane.b32.xlu0 %v652, 28
        %v684 = vpop.permute.xlu0 %683
        %v701 = vrot.slane %v235, 2
        %v702 = vrot.slane %v236, 2
        %v703 = vsel %vm351, %v701, %v702
        %v704 = vrot.slane %v237, 2
        %v705 = vsel %vm351, %v702, %v704
        %706 = vrot.lane.b32.xlu0 %v364, 32
        %v707 = vpop.permute.xlu0 %706
        %708 = vrot.lane.b32.xlu0 %v366, 32
        %v709 = vpop.permute.xlu0 %708
        %710 = vrot.lane.b32.xlu0 %v369, 32
        %v711 = vpop.permute.xlu0 %710
        %712 = vrot.lane.b32.xlu0 %v371, 32
        %v713 = vpop.permute.xlu0 %712
        %714 = vrot.lane.b32.xlu0 %v374, 32
        %v715 = vpop.permute.xlu0 %714
        %716 = vrot.lane.b32.xlu0 %v376, 32
        %v717 = vpop.permute.xlu0 %716
        %718 = vrot.lane.b32.xlu0 %v379, 32
        %v719 = vpop.permute.xlu0 %718
        %720 = vrot.lane.b32.xlu0 %v381, 32
        %v721 = vpop.permute.xlu0 %720
        %722 = vrot.lane.b32.xlu0 %v384, 32
        %v723 = vpop.permute.xlu0 %722
        %724 = vrot.lane.b32.xlu0 %v386, 32
        %v725 = vpop.permute.xlu0 %724
        %726 = vrot.lane.b32.xlu0 %v389, 32
        %v727 = vpop.permute.xlu0 %726
        %728 = vrot.lane.b32.xlu0 %v391, 32
        %v729 = vpop.permute.xlu0 %728
        %730 = vrot.lane.b32.xlu0 %v546, 32
        %v731 = vpop.permute.xlu0 %730
        %732 = vrot.lane.b32.xlu0 %v548, 32
        %v733 = vpop.permute.xlu0 %732
        %734 = vrot.lane.b32.xlu0 %v703, 32
        %v735 = vpop.permute.xlu0 %734
        %736 = vrot.lane.b32.xlu0 %v705, 32
        %v737 = vpop.permute.xlu0 %736
        %vm754 = vcmask 31744
        %v755 = vsel %vm754, %v208, %v304
        %v756 = vsel %vm754, %v209, %v306
        %v757 = vsel %vm754, %v211, %v308
        %v758 = vsel %vm754, %v212, %v310
        %v759 = vsel %vm754, %v214, %v312
        %v760 = vsel %vm754, %v215, %v314
        %v761 = vsel %vm754, %v217, %v316
        %v762 = vsel %vm754, %v218, %v318
        %v763 = vsel %vm754, %v220, %v320
        %v764 = vsel %vm754, %v221, %v322
        %v765 = vsel %vm754, %v223, %v324
        %v766 = vsel %vm754, %v224, %v326
        %v767 = vsel %vm754, %v226, %v328
        %v768 = vsel %vm754, %v227, %v330
        %v769 = vsel %vm754, %v229, %v332
        %v770 = vsel %vm754, %v230, %v334
        %vm771 = vcmask 64512
        %v772 = vsel %vm771, %v755, %v393
        %v773 = vsel %vm771, %v756, %v395
        %v774 = vsel %vm771, %v757, %v397
        %v775 = vsel %vm771, %v758, %v399
        %v776 = vsel %vm771, %v759, %v401
        %v777 = vsel %vm771, %v760, %v403
        %v778 = vsel %vm771, %v761, %v405
        %v779 = vsel %vm771, %v762, %v407
        %v780 = vsel %vm771, %v763, %v409
        %v781 = vsel %vm771, %v764, %v411
        %v782 = vsel %vm771, %v765, %v413
        %v783 = vsel %vm771, %v766, %v415
        %v784 = vsel %vm771, %v767, %v417
        %v785 = vsel %vm771, %v768, %v419
        %v786 = vsel %vm771, %v769, %v421
        %v787 = vsel %vm771, %v770, %v423
        %vm788 = vcmask 97280
        %v789 = vsel %vm788, %v772, %v443
        %v790 = vsel %vm788, %v773, %v445
        %v791 = vsel %vm788, %v774, %v447
        %v792 = vsel %vm788, %v775, %v449
        %v793 = vsel %vm788, %v776, %v451
        %v794 = vsel %vm788, %v777, %v453
        %v795 = vsel %vm788, %v778, %v455
        %v796 = vsel %vm788, %v779, %v457
        %v797 = vsel %vm788, %v780, %v459
        %v798 = vsel %vm788, %v781, %v461
        %v799 = vsel %vm788, %v782, %v463
        %v800 = vsel %vm788, %v783, %v465
        %v801 = vsel %vm788, %v784, %v467
        %v802 = vsel %vm788, %v785, %v469
        %v803 = vsel %vm788, %v786, %v471
        %v804 = vsel %vm788, %v787, %v473
        %vm805 = vcmask 130048
        %v806 = vsel %vm805, %v789, %v497
        %v807 = vsel %vm805, %v790, %v499
        %v808 = vsel %vm805, %v791, %v501
        %v809 = vsel %vm805, %v792, %v503
        %v810 = vsel %vm805, %v793, %v505
        %v811 = vsel %vm805, %v794, %v507
        %v812 = vsel %vm805, %v795, %v509
        %v813 = vsel %vm805, %v796, %v511
        %v814 = vsel %vm805, %v797, %v513
        %v815 = vsel %vm805, %v798, %v515
        %v816 = vsel %vm805, %v799, %v517
        %v817 = vsel %vm805, %v800, %v519
        %v818 = vsel %vm805, %v801, %v521
        %v819 = vsel %vm805, %v802, %v523
        %v820 = vsel %vm805, %v803, %v525
        %v821 = vsel %vm805, %v804, %v527
        %vm822 = vcmask 162816
        %v823 = vsel %vm822, %v806, %v550
        %v824 = vsel %vm822, %v807, %v552
        %v825 = vsel %vm822, %v808, %v554
        %v826 = vsel %vm822, %v809, %v556
        %v827 = vsel %vm822, %v810, %v558
        %v828 = vsel %vm822, %v811, %v560
        %v829 = vsel %vm822, %v812, %v562
        %v830 = vsel %vm822, %v813, %v564
        %v831 = vsel %vm822, %v814, %v566
        %v832 = vsel %vm822, %v815, %v568
        %v833 = vsel %vm822, %v816, %v570
        %v834 = vsel %vm822, %v817, %v572
        %v835 = vsel %vm822, %v818, %v574
        %v836 = vsel %vm822, %v819, %v576
        %v837 = vsel %vm822, %v820, %v578
        %v838 = vsel %vm822, %v821, %v580
        %vm839 = vcmask 195584
        %v840 = vsel %vm839, %v823, %v600
        %v841 = vsel %vm839, %v824, %v602
        %v842 = vsel %vm839, %v825, %v604
        %v843 = vsel %vm839, %v826, %v606
        %v844 = vsel %vm839, %v827, %v608
        %v845 = vsel %vm839, %v828, %v610
        %v846 = vsel %vm839, %v829, %v612
        %v847 = vsel %vm839, %v830, %v614
        %v848 = vsel %vm839, %v831, %v616
        %v849 = vsel %vm839, %v832, %v618
        %v850 = vsel %vm839, %v833, %v620
        %v851 = vsel %vm839, %v834, %v622
        %v852 = vsel %vm839, %v835, %v624
        %v853 = vsel %vm839, %v836, %v626
        %v854 = vsel %vm839, %v837, %v628
        %v855 = vsel %vm839, %v838, %v630
        %vm856 = vcmask 228352
        %v857 = vsel %vm856, %v840, %v654
        %v858 = vsel %vm856, %v841, %v656
        %v859 = vsel %vm856, %v842, %v658
        %v860 = vsel %vm856, %v843, %v660
        %v861 = vsel %vm856, %v844, %v662
        %v862 = vsel %vm856, %v845, %v664
        %v863 = vsel %vm856, %v846, %v666
        %v864 = vsel %vm856, %v847, %v668
        %v865 = vsel %vm856, %v848, %v670
        %v866 = vsel %vm856, %v849, %v672
        %v867 = vsel %vm856, %v850, %v674
        %v868 = vsel %vm856, %v851, %v676
        %v869 = vsel %vm856, %v852, %v678
        %v870 = vsel %vm856, %v853, %v680
        %v871 = vsel %vm856, %v854, %v682
        %v872 = vsel %vm856, %v855, %v684
        %vm873 = vcmask 261120
        %v874 = vsel %vm873, %v857, %v707
        %v875 = vsel %vm873, %v858, %v709
        %v876 = vsel %vm873, %v859, %v711
        %v877 = vsel %vm873, %v860, %v713
        %v878 = vsel %vm873, %v861, %v715
        %v879 = vsel %vm873, %v862, %v717
        %v880 = vsel %vm873, %v863, %v719
        %v881 = vsel %vm873, %v864, %v721
        %v882 = vsel %vm873, %v865, %v723
        %v883 = vsel %vm873, %v866, %v725
        %v884 = vsel %vm873, %v867, %v727
        %v885 = vsel %vm873, %v868, %v729
        %v886 = vsel %vm873, %v869, %v731
        %v887 = vsel %vm873, %v870, %v733
        %v888 = vsel %vm873, %v871, %v735
        %v889 = vsel %vm873, %v872, %v737
        %v890 = vld [vmem:[%s1] sm:$0xff]
        %v891 = vld [vmem:[%s1 + $0x8] sm:$0xff]
        %v892 = vld [vmem:[%s1 + $0x10] sm:$0xff]
        %v893 = vld [vmem:[%s1 + $0x18] sm:$0xff]
        %v894 = vld [vmem:[%s1 + $0x20] sm:$0xf]
        %v895 = vld [vmem:[%s2] sm:$0x1]
        %v897 = vperm.slane %v895, 0
        %vm899 = vcmask 293888
        %v901 = vsel %vm899, %v874, 0
        %v904 = vsel %vm899, %v875, 0
        %v907 = vsel %vm899, %v876, 0
        %v910 = vsel %vm899, %v877, 0
        %v913 = vsel %vm899, %v878, 0
        %v916 = vsel %vm899, %v879, 0
        %v919 = vsel %vm899, %v880, 0
        %v922 = vsel %vm899, %v881, 0
        %v925 = vsel %vm899, %v882, 0
        %v928 = vsel %vm899, %v883, 0
        %v931 = vsel %vm899, %v884, 0
        %v934 = vsel %vm899, %v885, 0
        %v937 = vsel %vm899, %v886, 0
        %v940 = vsel %vm899, %v887, 0
        %v943 = vsel %vm899, %v888, 0
        %v946 = vsel %vm899, %v889, 0
        %vm948 = vcmask 1043456
        %v950 = vsel %vm948, %v894, 0
        %952 = vmatpush.msra.mxu0 0.0
        %953 = vmatpush.msra.mxu0 0.0
        %954 = vmatpush.msra.mxu0 0.0
        %955 = vmatpush.msra.mxu0 0.0
        %956 = vmatpush.msra.mxu0 0.0
        %957 = vmatpush.msra.mxu0 0.0
        %958 = vmatpush.msra.mxu0 0.0
        %959 = vmatpush.msra.mxu0 0.0
        %960 = vmatpush.msra.mxu0 0.0
        %961 = vmatpush.msra.mxu0 0.0
        %962 = vmatpush.msra.mxu0 0.0
        %963 = vmatpush.msra.mxu0 %v950
        %964 = vmatpush.msra.mxu0 %v893
        %965 = vmatpush.msra.mxu0 %v892
        %966 = vmatpush.msra.mxu0 %v891
        %967 = vmatpush.msra.mxu0 %v890
        %968 = vmatmul.f32.gmra.mxu0 %v901
        %v969 = vpop.f32.mrf.mxu0
        %v970 = vadd.f32 %v897, %v969
        %971 = vmatmul.f32.gmra.mxu0 %v904
        %v972 = vpop.f32.mrf.mxu0
        %v973 = vadd.f32 %v897, %v972
        %974 = vmatmul.f32.gmra.mxu0 %v907
        %v975 = vpop.f32.mrf.mxu0
        %v976 = vadd.f32 %v897, %v975
        %977 = vmatmul.f32.gmra.mxu0 %v910
        %v978 = vpop.f32.mrf.mxu0
        %v979 = vadd.f32 %v897, %v978
        %980 = vmatmul.f32.gmra.mxu0 %v913
        %v981 = vpop.f32.mrf.mxu0
        %v982 = vadd.f32 %v897, %v981
        %983 = vmatmul.f32.gmra.mxu0 %v916
        %v984 = vpop.f32.mrf.mxu0
        %v985 = vadd.f32 %v897, %v984
        %986 = vmatmul.f32.gmra.mxu0 %v919
        %v987 = vpop.f32.mrf.mxu0
        %v988 = vadd.f32 %v897, %v987
        %989 = vmatmul.f32.gmra.mxu0 %v922
        %v990 = vpop.f32.mrf.mxu0
        %v991 = vadd.f32 %v897, %v990
        %992 = vmatmul.f32.gmra.mxu0 %v925
        %v993 = vpop.f32.mrf.mxu0
        %v994 = vadd.f32 %v897, %v993
        %995 = vmatmul.f32.gmra.mxu0 %v928
        %v996 = vpop.f32.mrf.mxu0
        %v997 = vadd.f32 %v897, %v996
        %998 = vmatmul.f32.gmra.mxu0 %v931
        %v999 = vpop.f32.mrf.mxu0
        %v1000 = vadd.f32 %v897, %v999
        %1001 = vmatmul.f32.gmra.mxu0 %v934
        %v1002 = vpop.f32.mrf.mxu0
        %v1003 = vadd.f32 %v897, %v1002
        %1004 = vmatmul.f32.gmra.mxu0 %v937
        %v1005 = vpop.f32.mrf.mxu0
        %v1006 = vadd.f32 %v897, %v1005
        %1007 = vmatmul.f32.gmra.mxu0 %v940
        %v1008 = vpop.f32.mrf.mxu0
        %v1009 = vadd.f32 %v897, %v1008
        %1010 = vmatmul.f32.gmra.mxu0 %v943
        %v1011 = vpop.f32.mrf.mxu0
        %v1012 = vadd.f32 %v897, %v1011
        %1013 = vmatmul.f32.gmra.mxu0 %v946
        %v1014 = vpop.f32.mrf.mxu0
        %v1015 = vadd.f32 %v897, %v1014
        %1016 = vdwg.mxu0
        %p1017 = scmp.eq.s32.totalorder %s23, 0
        %p1018 = scmp.eq.s32.totalorder %s24, 0
        %p1019 = pnand %p1017, %p1018
        %p1020 = pneg %p1019
        // Predicated region
        $region33: #{tpu_custom_call.1} parent=31 // pred_check
          _
        $region34: #{tpu_custom_call.1} parent=31 // pred_check_branch
          %1022 = sbr.rel (%p1019) target = $region36
        $region35: #{tpu_custom_call.1} parent=31 // pred_region
          %vm1023 = vcmask 253952
          %1024 = vst.msk [vmem:[#allocation2] sm:$0x1] %vm1023, 0.0
          %1025 = vst.msk [vmem:[#allocation3] sm:$0x1] %vm1023, 0.0
        $region36: #{tpu_custom_call.1} parent=31 // pred_fallthru
          _
        // Predicated region
        $region37: #{tpu_custom_call.1} parent=31 // pred_check
          %p1026 = pneg %p1017
        $region38: #{tpu_custom_call.1} parent=31 // pred_check_branch
          %1028 = sbr.rel (%p1026) target = $region40
        $region39: #{tpu_custom_call.1} parent=31 // pred_region
          %v1029 = vld [vmem:[#allocation2] sm:$0x1]
          %v1030 = vsel %vm873, %v970, 0.0
          %v1031 = vsel %vm873, %v973, 0.0
          %v1032 = vadd.f32 %v1030, %v1031
          %v1033 = vsel %vm873, %v976, 0.0
          %v1034 = vadd.f32 %v1032, %v1033
          %v1035 = vsel %vm873, %v979, 0.0
          %v1036 = vadd.f32 %v1034, %v1035
          %v1037 = vsel %vm873, %v982, 0.0
          %v1038 = vadd.f32 %v1036, %v1037
          %v1039 = vsel %vm873, %v985, 0.0
          %v1040 = vadd.f32 %v1038, %v1039
          %v1041 = vsel %vm873, %v988, 0.0
          %v1042 = vadd.f32 %v1040, %v1041
          %v1043 = vsel %vm873, %v991, 0.0
          %v1044 = vadd.f32 %v1042, %v1043
          %v1045 = vsel %vm873, %v994, 0.0
          %v1046 = vadd.f32 %v1044, %v1045
          %v1047 = vsel %vm873, %v997, 0.0
          %v1048 = vadd.f32 %v1046, %v1047
          %v1049 = vsel %vm873, %v1000, 0.0
          %v1050 = vadd.f32 %v1048, %v1049
          %v1051 = vsel %vm873, %v1003, 0.0
          %v1052 = vadd.f32 %v1050, %v1051
          %v1053 = vsel %vm873, %v1006, 0.0
          %v1054 = vadd.f32 %v1052, %v1053
          %v1055 = vsel %vm873, %v1009, 0.0
          %v1056 = vadd.f32 %v1054, %v1055
          %v1057 = vsel %vm873, %v1012, 0.0
          %v1058 = vadd.f32 %v1056, %v1057
          %v1059 = vsel %vm873, %v1015, 0.0
          %v1060 = vadd.f32 %v1058, %v1059
          %v1061 = vrot.slane %v1060, 4
          %v1062 = vadd.f32 %v1060, %v1061
          %v1063 = vrot.slane %v1062, 2
          %v1064 = vadd.f32 %v1062, %v1063
          %v1065 = vrot.slane %v1064, 1
          %v1066 = vadd.f32 %v1064, %v1065
          %v1067 = vadd.f32 %v1029, %v1066
          %vm1068 = vcmask 253952
          %1069 = vst.msk [vmem:[#allocation2] sm:$0x1] %vm1068, %v1067
          %v1070 = vld [vmem:[#allocation3] sm:$0x1]
          %v1071 = vmul.f32 %v970, %v970
          %v1072 = vmul.f32 %v973, %v973
          %v1073 = vmul.f32 %v976, %v976
          %v1074 = vmul.f32 %v979, %v979
          %v1075 = vmul.f32 %v982, %v982
          %v1076 = vmul.f32 %v985, %v985
          %v1077 = vmul.f32 %v988, %v988
          %v1078 = vmul.f32 %v991, %v991
          %v1079 = vmul.f32 %v994, %v994
          %v1080 = vmul.f32 %v997, %v997
          %v1081 = vmul.f32 %v1000, %v1000
          %v1082 = vmul.f32 %v1003, %v1003
          %v1083 = vmul.f32 %v1006, %v1006
          %v1084 = vmul.f32 %v1009, %v1009
          %v1085 = vmul.f32 %v1012, %v1012
          %v1086 = vmul.f32 %v1015, %v1015
          %v1087 = vsel %vm873, %v1071, 0.0
          %v1088 = vsel %vm873, %v1072, 0.0
          %v1089 = vadd.f32 %v1087, %v1088
          %v1090 = vsel %vm873, %v1073, 0.0
          %v1091 = vadd.f32 %v1089, %v1090
          %v1092 = vsel %vm873, %v1074, 0.0
          %v1093 = vadd.f32 %v1091, %v1092
          %v1094 = vsel %vm873, %v1075, 0.0
          %v1095 = vadd.f32 %v1093, %v1094
          %v1096 = vsel %vm873, %v1076, 0.0
          %v1097 = vadd.f32 %v1095, %v1096
          %v1098 = vsel %vm873, %v1077, 0.0
          %v1099 = vadd.f32 %v1097, %v1098
          %v1100 = vsel %vm873, %v1078, 0.0
          %v1101 = vadd.f32 %v1099, %v1100
          %v1102 = vsel %vm873, %v1079, 0.0
          %v1103 = vadd.f32 %v1101, %v1102
          %v1104 = vsel %vm873, %v1080, 0.0
          %v1105 = vadd.f32 %v1103, %v1104
          %v1106 = vsel %vm873, %v1081, 0.0
          %v1107 = vadd.f32 %v1105, %v1106
          %v1108 = vsel %vm873, %v1082, 0.0
          %v1109 = vadd.f32 %v1107, %v1108
          %v1110 = vsel %vm873, %v1083, 0.0
          %v1111 = vadd.f32 %v1109, %v1110
          %v1112 = vsel %vm873, %v1084, 0.0
          %v1113 = vadd.f32 %v1111, %v1112
          %v1114 = vsel %vm873, %v1085, 0.0
          %v1115 = vadd.f32 %v1113, %v1114
          %v1116 = vsel %vm873, %v1086, 0.0
          %v1117 = vadd.f32 %v1115, %v1116
          %v1118 = vrot.slane %v1117, 4
          %v1119 = vadd.f32 %v1117, %v1118
          %v1120 = vrot.slane %v1119, 2
          %v1121 = vadd.f32 %v1119, %v1120
          %v1122 = vrot.slane %v1121, 1
          %v1123 = vadd.f32 %v1121, %v1122
          %v1124 = vadd.f32 %v1070, %v1123
          %1125 = vst.msk [vmem:[#allocation3] sm:$0x1] %vm1068, %v1124
        $region40: #{tpu_custom_call.1} parent=31 // pred_fallthru
          _
        %p1126 = scmp.eq.s32.totalorder %s23, 1
        // Predicated region
        $region41: #{tpu_custom_call.1} parent=31 // pred_check
          %p1127 = pneg %p1126
        $region42: #{tpu_custom_call.1} parent=31 // pred_check_branch
          %1129 = sbr.rel (%p1127) target = $region44
        $region43: #{tpu_custom_call.1} parent=31 // pred_region
          %v1130 = vld [vmem:[#allocation2] sm:$0x1]
          %v1131 = vld [vmem:[#allocation3] sm:$0x1]
          %1133 = vrot.lane.b32.xlu0 %v1130, 120
          %v1134 = vpop.permute.xlu0 %1133
          %v1136 = vadd.f32 %v1130, %v1134
          %1137 = vrot.lane.b32.xlu0 %v1130, 112
          %v1138 = vpop.permute.xlu0 %1137
          %v1140 = vadd.f32 %v1136, %v1138
          %1141 = vrot.lane.b32.xlu0 %v1130, 104
          %v1142 = vpop.permute.xlu0 %1141
          %v1144 = vadd.f32 %v1140, %v1142
          %1146 = vrot.lane.b32.xlu0 %v1131, 120
          %v1147 = vpop.permute.xlu0 %1146
          %v1149 = vadd.f32 %v1131, %v1147
          %1150 = vrot.lane.b32.xlu0 %v1131, 112
          %v1151 = vpop.permute.xlu0 %1150
          %v1153 = vadd.f32 %v1149, %v1151
          %1154 = vrot.lane.b32.xlu0 %v1131, 104
          %v1155 = vpop.permute.xlu0 %1154
          %v1157 = vadd.f32 %v1153, %v1155
          %v1158 = vmul.f32 %v1144, 0.0009765625
          %v1159 = vmul.f32 %v1157, 0.0009765625
          %v1160 = vmul.f32 %v1158, %v1158
          %v1161 = vsub.f32 %v1159, %v1160
          %v1162 = vadd.f32 %v1161, 1e-05
          %v1163 = vrsqrt.pop %v1162
          %v1164 = vmul.f32 %v1163, %v1162
          %v1165 = vmul.f32 %v1164, %v1163
          %v1166 = vmul.f32 0.5, %v1165
          %v1167 = vsub.f32 1.5, %v1166
          %v1168 = vmul.f32 %v1163, %v1167
          %vm1169 = vweird.f32 %v1162
          %vm1170 = vweird.f32 %v1163
          %vm1171 = vmor %vm1169, %vm1170
          %v1172 = vsel %vm1171, %v1163, %v1168
          %v1174 = vperm.slane %v1158, 0
          %1175 = vrot.lane.b32.xlu0 %v1174, 8
          %v1176 = vpop.permute.xlu0 %1175
          %1178 = vrot.lane.b32.xlu0 %v1174, 16
          %v1179 = vpop.permute.xlu0 %1178
          %1181 = vrot.lane.b32.xlu0 %v1174, 24
          %v1182 = vpop.permute.xlu0 %1181
          %v1184 = vsel %vm771, %v1158, %v1176
          %v1185 = vsel %vm805, %v1184, %v1179
          %v1186 = vsel %vm839, %v1185, %v1182
          %v1188 = vperm.slane %v1172, 0
          %1189 = vrot.lane.b32.xlu0 %v1188, 8
          %v1190 = vpop.permute.xlu0 %1189
          %1192 = vrot.lane.b32.xlu0 %v1188, 16
          %v1193 = vpop.permute.xlu0 %1192
          %1195 = vrot.lane.b32.xlu0 %v1188, 24
          %v1196 = vpop.permute.xlu0 %1195
          %v1198 = vsel %vm771, %v1172, %v1190
          %v1199 = vsel %vm805, %v1198, %v1193
          %v1200 = vsel %vm839, %v1199, %v1196
          %v1201 = vperm.slane %v1186, 0
          %v1202 = vsub.f32 %v970, %v1201
          %v1203 = vsub.f32 %v973, %v1201
          %v1204 = vsub.f32 %v976, %v1201
          %v1205 = vsub.f32 %v979, %v1201
          %v1206 = vsub.f32 %v982, %v1201
          %v1207 = vsub.f32 %v985, %v1201
          %v1208 = vsub.f32 %v988, %v1201
          %v1209 = vsub.f32 %v991, %v1201
          %v1210 = vsub.f32 %v994, %v1201
          %v1211 = vsub.f32 %v997, %v1201
          %v1212 = vsub.f32 %v1000, %v1201
          %v1213 = vsub.f32 %v1003, %v1201
          %v1214 = vsub.f32 %v1006, %v1201
          %v1215 = vsub.f32 %v1009, %v1201
          %v1216 = vsub.f32 %v1012, %v1201
          %v1217 = vsub.f32 %v1015, %v1201
          %v1218 = vperm.slane %v1200, 0
          %v1219 = vmul.f32 %v1202, %v1218
          %v1220 = vmul.f32 %v1203, %v1218
          %v1221 = vmul.f32 %v1204, %v1218
          %v1222 = vmul.f32 %v1205, %v1218
          %v1223 = vmul.f32 %v1206, %v1218
          %v1224 = vmul.f32 %v1207, %v1218
          %v1225 = vmul.f32 %v1208, %v1218
          %v1226 = vmul.f32 %v1209, %v1218
          %v1227 = vmul.f32 %v1210, %v1218
          %v1228 = vmul.f32 %v1211, %v1218
          %v1229 = vmul.f32 %v1212, %v1218
          %v1230 = vmul.f32 %v1213, %v1218
          %v1231 = vmul.f32 %v1214, %v1218
          %v1232 = vmul.f32 %v1215, %v1218
          %v1233 = vmul.f32 %v1216, %v1218
          %v1234 = vmul.f32 %v1217, %v1218
          %v1235 = vmax.f32 %v1219, 0.0
          %v1236 = vmax.f32 %v1220, 0.0
          %v1237 = vmax.f32 %v1221, 0.0
          %v1238 = vmax.f32 %v1222, 0.0
          %v1239 = vmax.f32 %v1223, 0.0
          %v1240 = vmax.f32 %v1224, 0.0
          %v1241 = vmax.f32 %v1225, 0.0
          %v1242 = vmax.f32 %v1226, 0.0
          %v1243 = vmax.f32 %v1227, 0.0
          %v1244 = vmax.f32 %v1228, 0.0
          %v1245 = vmax.f32 %v1229, 0.0
          %v1246 = vmax.f32 %v1230, 0.0
          %v1247 = vmax.f32 %v1231, 0.0
          %v1248 = vmax.f32 %v1232, 0.0
          %v1249 = vmax.f32 %v1233, 0.0
          %v1250 = vmax.f32 %v1234, 0.0
          %1251 = vst.msk [vmem:[%s196] sm:$0xff] %vm873, %v1235
          %1252 = vst.msk [vmem:[%s196 + $0x8] sm:$0xff] %vm873, %v1236
          %1253 = vst.msk [vmem:[%s196 + $0x10] sm:$0xff] %vm873, %v1237
          %1254 = vst.msk [vmem:[%s196 + $0x18] sm:$0xff] %vm873, %v1238
          %1255 = vst.msk [vmem:[%s196 + $0x20] sm:$0xff] %vm873, %v1239
          %1256 = vst.msk [vmem:[%s196 + $0x28] sm:$0xff] %vm873, %v1240
          %1257 = vst.msk [vmem:[%s196 + $0x30] sm:$0xff] %vm873, %v1241
          %1258 = vst.msk [vmem:[%s196 + $0x38] sm:$0xff] %vm873, %v1242
          %1259 = vst.msk [vmem:[%s196 + $0x40] sm:$0xff] %vm873, %v1243
          %1260 = vst.msk [vmem:[%s196 + $0x48] sm:$0xff] %vm873, %v1244
          %1261 = vst.msk [vmem:[%s196 + $0x50] sm:$0xff] %vm873, %v1245
          %1262 = vst.msk [vmem:[%s196 + $0x58] sm:$0xff] %vm873, %v1246
          %1263 = vst.msk [vmem:[%s196 + $0x60] sm:$0xff] %vm873, %v1247
          %1264 = vst.msk [vmem:[%s196 + $0x68] sm:$0xff] %vm873, %v1248
          %1265 = vst.msk [vmem:[%s196 + $0x70] sm:$0xff] %vm873, %v1249
          %1266 = vst.msk [vmem:[%s196 + $0x78] sm:$0xff] %vm873, %v1250
        $region44: #{tpu_custom_call.1} parent=31 // pred_fallthru
          _
        %s1267 = sand.u32 %s118, 1
        %s1268 = scalar_lea.sflag [#allocation5], %s1267
        %s1269 = sand.u32 %s118, 1
        %s1270 = smul.addr %s1269, 128
        %s1271 = scalar_lea.vmem [#allocation4], %s1270
        // Predicated region
        $region45: #{tpu_custom_call.1} parent=31 // pred_check
          %p1272 = pneg %p128
        $region46: #{tpu_custom_call.1} parent=31 // pred_check_branch
          %1274 = sbr.rel (%p1272) target = $region48
        $region47: #{tpu_custom_call.1} parent=31 // pred_region
          %s1275 = smul.u32 %s23, %s24
          %s1276 = smul.u32 8, %s1275
          %1278 = vsyncadd %s1268, 0
          %s1279 = smul.addr %s1276, 2
          %s1280 = smul.addr %s22, 32
          %s1281 = sadd.s32 %s1279, %s1280
          %s1282 = smul.addr %s1281, 8
          %s1283 = scalar_lea.hbm %s3, %s1282
          %s1284 = sshll.u32 %s1271, 4
          %s1285 = int_to_ptr.vmem [resolvable:$true] %s1284
          %s1286 = sshll.u32 %s1283, 4
          %s1287 = int_to_ptr.hbm [resolvable:$true] %s1286
          %1292 = dma.vmem_to_hbm [thread:$0]  %s1285, 2048, %s1287, %s1268, 128, 128, 8
        $region48: #{tpu_custom_call.1} parent=31 // pred_fallthru
          _
      $region32: #{tpu_custom_call.1} parent=5 // pred_fallthru
        _
      %p1293 = scmp.le.s32.totalorder 2, %s12
      // Predicated region
      $region49: #{tpu_custom_call.1} parent=5 // pred_check
        %p1294 = pneg %p1293
      $region50: #{tpu_custom_call.1} parent=5 // pred_check_branch
        %1296 = sbr.rel (%p1294) target = $region52
      $region51: #{tpu_custom_call.1} parent=5 // pred_region
        %s1297 = ssub.s32 %s12, 2
        // Predicated region
        $region53: #{tpu_custom_call.1} parent=51 // pred_check
          %p1298 = pneg %p134
        $region54: #{tpu_custom_call.1} parent=51 // pred_check_branch
          %1300 = sbr.rel (%p1298) target = $region56
        $region55: #{tpu_custom_call.1} parent=51 // pred_region
          %s1301 = sand.u32 %s119, 1
          %s1302 = scalar_lea.sflag [#allocation5], %s1301
          %s1303 = sand.u32 %s119, 1
          %s1304 = smul.addr %s1303, 128
          %s1305 = scalar_lea.vmem [#allocation4], %s1304
          %1307 = dma.done %s1302, 2048
        $region56: #{tpu_custom_call.1} parent=51 // pred_fallthru
          _
      $region52: #{tpu_custom_call.1} parent=5 // pred_fallthru
        _
    $region6: #{tpu_custom_call.1} parent=1 // loop_footer
      %s16 = sadd.s32 1, %s12
    $region7: #{tpu_custom_call.1} parent=1 // loop_footer_branch
      %11 = sbr.rel target = $region3
    $region8: #{tpu_custom_call.1} parent=1 // loop_exit
      _
    %1308 = vsyncpa [#allocation5], 1
    %s1309 = scalar_lea.sflag [#allocation5], 1
    %1310 = vsyncpa %s1309, 1

</llo_original>
